<compile_context>
chip_gen: v7x
topology: tpu7x:2x2x1
jax: 0.10.0
libtpu: 0.0.40
codegen_flags: <defaults>
</compile_context>

<pallas_src>
import numpy as np
import jax
import jax.numpy as jnp
from jax.experimental import pallas as pl
from jax.experimental.pallas import tpu as pltpu


# ---------------------------------------------------------------------------
# Constant-matrix setup (plain numpy glue, runs once at wrapper level).
# ---------------------------------------------------------------------------
def _up1d_matrix(n, fir, fir_kernel):
    """(2n, n) matrix U such that U @ x is the 1-D 2x upsample of x.

    fir=False -> nearest neighbour (F.interpolate mode='nearest').
    fir=True  -> upfirdn2d-style FIR upsample, factor=2, separable
                 `fir_kernel`, including the gain * factor**2 scaling.
    """
    n2 = 2 * n
    U = np.zeros((n2, n), np.float32)
    if not fir:
        for m in range(n2):
            U[m, m // 2] = 1.0
        return U
    k = np.asarray(fir_kernel, np.float32)
    k = k / k.sum() * 2.0           # per-dim taps; 2*2 == factor**2 total gain
    L = k.shape[0]
    p = L - 2                        # factor = 2
    pad0 = (p + 1) // 2 + 1          # (p+1)//2 + factor - 1
    for m in range(n2):
        for t in range(L):
            j = m + t - pad0         # index into the zero-inserted signal
            if 0 <= j < n2 and j % 2 == 0:
                U[m, j // 2] += k[t]
    return U


def _shift_matrix(U, tap):
    """Compose U with a 3x3-conv tap shift (1-px zero border), tap in {0,1,2}."""
    n2 = U.shape[0]
    S = np.zeros_like(U)
    for y in range(n2):
        p = y + tap                  # index into the zero-padded upsample
        if 1 <= p <= n2:
            S[y] = U[p - 1]
    return S


def _kron_matrix(A, Bt):
    """K (H*W, 2H*2W) with  vec(A @ X @ Bt) = vec(X) @ K.

    A: (2H, H) left (height) operator, Bt: (W, 2W) right (width) operator.
    K[(h*W+w), (y2*2W+x2)] = A[y2, h] * Bt[w, x2].
    """
    return np.kron(A.T, Bt)


def _tile(n):
    """Channel tile: 128 when it divides n (large-channel case), else full n."""
    return 128 if (n % 128 == 0) else n


# ---------------------------------------------------------------------------
# Pallas kernels.
# ---------------------------------------------------------------------------
def _up_kernel(x_ref, k_ref, o_ref):
    # x_ref: (1, Ct, H*W) bf16, k_ref: (H*W, 4*H*W) bf16, o_ref: (1, Ct, 4*H*W) f32
    # Single channel-batched MXU matmul, lane-dense output (last dim 4*H*W).
    o_ref[0, :, :] = jnp.dot(
        x_ref[0, :, :], k_ref[...],
        preferred_element_type=jnp.float32).astype(o_ref.dtype)


def _up_conv_kernel(x_ref, w_ref, b_ref, k_ref, o_ref, acc_ref):
    # x_ref: (1, C, HW) f32        w_ref: (9, OCt, C) f32    b_ref: (OCt, 1) f32
    # k_ref: (9, HW, 4HW) bf16     o_ref: (1, OCt, 4HW) f32  acc_ref: (OCt, 4HW) f32
    x = x_ref[0, :, :]                                   # hoisted, reused by all taps
    acc_ref[...] = jnp.zeros_like(acc_ref)
    for t in range(9):                                   # tap-major: one tap live at a time
        # channel mix at LOW resolution (small matmul, f32 for accuracy)
        mixed = jnp.dot(w_ref[t], x, preferred_element_type=jnp.float32)
        # shifted 2x upsample of the mixed block: dominant matmul, bf16 on the MXU
        acc_ref[...] += jnp.dot(mixed.astype(jnp.bfloat16), k_ref[t],
                                preferred_element_type=jnp.float32)
    # bias broadcast once per OC tile; lane-dense store (last dim 4*H*W)
    o_ref[0, :, :] = (acc_ref[...] + b_ref[...]).astype(o_ref.dtype)


# ---------------------------------------------------------------------------
# pallas_call wrappers.
# ---------------------------------------------------------------------------
def _upsample2x_pallas(x, *, fir, fir_kernel):
    B, C, H, W = x.shape
    HW, HW4 = H * W, 4 * H * W
    U_h = _up1d_matrix(H, fir, fir_kernel)               # (2H, H)
    U_w = _up1d_matrix(W, fir, fir_kernel)               # (2W, W)
    K = jnp.asarray(_kron_matrix(U_h, U_w.T), dtype=jnp.bfloat16)   # (HW, 4HW), exact in bf16
    x2 = x.reshape(B, C, HW).astype(jnp.bfloat16)        # free reshape; bf16 feed for the MXU
    CT = _tile(C)
    out = pl.pallas_call(
        _up_kernel,
        out_shape=jax.ShapeDtypeStruct((B, C, HW4), jnp.float32),
        grid=(B, C // CT),
        in_specs=[
            pl.BlockSpec((1, CT, HW), lambda b, c: (b, c, 0)),
            pl.BlockSpec((HW, HW4), lambda b, c: (0, 0)),
        ],
        out_specs=pl.BlockSpec((1, CT, HW4), lambda b, c: (b, c, 0)),
        compiler_params=pltpu.CompilerParams(
            dimension_semantics=("parallel", "parallel"),
            vmem_limit_bytes=64 * 1024 * 1024),
    )(x2, K)
    return out.reshape(B, C, 2 * H, 2 * W)               # contiguous -> free reshape


def _upsample2x_conv3x3_pallas(x, weight, bias, *, fir, fir_kernel):
    B, C, H, W = x.shape
    OC = weight.shape[0]
    HW, HW4 = H * W, 4 * H * W
    U_h = _up1d_matrix(H, fir, fir_kernel)
    U_w = _up1d_matrix(W, fir, fir_kernel)
    Dt = [_shift_matrix(U_h, t) for t in range(3)]       # (2H, H) shifted height ops
    Et = [_shift_matrix(U_w, t).T for t in range(3)]     # (W, 2W) shifted width ops
    Ks = np.stack([_kron_matrix(Dt[ky], Et[kx])
                   for ky in range(3) for kx in range(3)])          # (9, HW, 4HW)
    Ks = jnp.asarray(Ks, dtype=jnp.bfloat16)             # 0/1 or FIR-tap products: exact in bf16
    Wt = jnp.transpose(weight, (2, 3, 0, 1)).reshape(9, OC, C).astype(jnp.float32)
    b2 = bias.reshape(OC, 1).astype(jnp.float32)
    x2 = x.reshape(B, C, HW).astype(jnp.float32)
    OCT = _tile(OC)
    out = pl.pallas_call(
        _up_conv_kernel,
        out_shape=jax.ShapeDtypeStruct((B, OC, HW4), jnp.float32),
        grid=(B, OC // OCT),
        in_specs=[
            pl.BlockSpec((1, C, HW), lambda b, o: (b, 0, 0)),        # input block
            pl.BlockSpec((9, OCT, C), lambda b, o: (0, o, 0)),       # conv weights (VMEM, per-OC tile)
            pl.BlockSpec((OCT, 1), lambda b, o: (o, 0)),             # bias (VMEM)
            pl.BlockSpec((9, HW, HW4), lambda b, o: (0, 0, 0)),      # 9 tap upsample operators
        ],
        out_specs=pl.BlockSpec((1, OCT, HW4), lambda b, o: (b, o, 0)),
        scratch_shapes=[pltpu.VMEM((OCT, HW4), jnp.float32)],        # f32 accumulator
        compiler_params=pltpu.CompilerParams(
            dimension_semantics=("parallel", "parallel"),
            vmem_limit_bytes=64 * 1024 * 1024),
    )(x2, Wt, b2, Ks)
    return out.reshape(B, OC, 2 * H, 2 * W)


# ---------------------------------------------------------------------------
# Module wrapper (mirrors layerspp.Upsample).
# ---------------------------------------------------------------------------
class UpsamplePallas:
    """Pallas port of Upsample(out_ch, with_conv, fir, fir_kernel).

    Note: the PyTorch forward builds a *fresh* randomly-initialized conv on
    every call; here the conv parameters are created deterministically once
    in __init__ (same shapes: weight (out_ch, C, 3, 3), bias (out_ch,)).
    """
    # TODO(synk): the provided `_simple_upfirdn_2d` (F.conv2d with a (1,1,kh,kw)
    # weight and stride=up) is self-inconsistent for C>1 and fails the module's
    # own 2x-shape assert; the fir=True path below implements the intended
    # upfirdn2d 2x upsample semantics instead.
    def __init__(self, in_ch, out_ch=None, with_conv=False, fir=False,
                 fir_kernel=(1, 3, 3, 1), key=None):
        self.in_ch = in_ch
        self.out_ch = out_ch if out_ch else in_ch
        self.with_conv = with_conv
        self.fir = fir
        self.fir_kernel = fir_kernel
        self.weight = None
        self.bias = None
        if with_conv:
            key = jax.random.PRNGKey(42) if key is None else key
            kw, kb = jax.random.split(key)
            bound = 1.0 / np.sqrt(in_ch * 9)
            self.weight = jax.random.uniform(
                kw, (self.out_ch, in_ch, 3, 3), jnp.float32, -bound, bound)
            self.bias = jax.random.uniform(
                kb, (self.out_ch,), jnp.float32, -bound, bound)

    def __call__(self, x):
        B, C, H, W = x.shape
        assert C == self.in_ch
        if self.with_conv:
            h = _upsample2x_conv3x3_pallas(
                x, self.weight, self.bias, fir=self.fir, fir_kernel=self.fir_kernel)
        else:
            h = _upsample2x_pallas(x, fir=self.fir, fir_kernel=self.fir_kernel)
        assert h.shape == (B, self.out_ch, 2 * H, 2 * W)
        return h


# ---------------------------------------------------------------------------
# Pure-JAX reference (for validation).
# ---------------------------------------------------------------------------
def _reference(x, mod):
    x = x.astype(jnp.float32)
    B, C, H, W = x.shape
    if not mod.fir:
        h = jnp.repeat(jnp.repeat(x, 2, axis=2), 2, axis=3)
    else:
        k = np.asarray(mod.fir_kernel, np.float32)
        k2 = np.outer(k, k)
        k2 = k2 / k2.sum() * 4.0
        L = k2.shape[0]
        p = L - 2
        pad0 = (p + 1) // 2 + 1
        pad1 = p // 2 + 1            # +1 accounts for the trailing dilation zero
        kern = jnp.asarray(np.tile(k2[None, None], (C, 1, 1, 1)))  # (C,1,L,L)
        h = jax.lax.conv_general_dilated(
            x, kern, window_strides=(1, 1),
            padding=((pad0, pad1), (pad0, pad1)),
            lhs_dilation=(2, 2), rhs_dilation=(1, 1),
            dimension_numbers=('NCHW', 'OIHW', 'NCHW'),
            feature_group_count=C, precision=jax.lax.Precision.HIGHEST)
    if mod.with_conv:
        h = jax.lax.conv_general_dilated(
            h, mod.weight, window_strides=(1, 1), padding=((1, 1), (1, 1)),
            dimension_numbers=('NCHW', 'OIHW', 'NCHW'),
            precision=jax.lax.Precision.HIGHEST) + mod.bias[None, :, None, None]
    return h


if __name__ == "__main__":
    key = jax.random.PRNGKey(0)
    kx, kp = jax.random.split(key)
    B, C, H, W = 2, 4, 16, 16
    x = jax.random.normal(kx, (B, C, H, W), jnp.float32)

    configs = [
        dict(with_conv=False, fir=False),   # default path: nearest 2x
        dict(with_conv=True,  fir=False),   # nearest 2x + conv3x3
        dict(with_conv=False, fir=True),    # FIR (upfirdn) 2x
        dict(with_conv=True,  fir=True),    # FIR 2x + conv3x3
    ]
    for cfg in configs:
        mod = UpsamplePallas(C, out_ch=None, key=kp, **cfg)
        out = jax.block_until_ready(mod(x))
        assert out.shape == (B, C, 2 * H, 2 * W)
        ref = _reference(x, mod)
        np.testing.assert_allclose(np.asarray(out), np.asarray(ref),
                                   rtol=2e-2, atol=2e-2)
    print("KERNEL_OK")
</pallas_src>

<mosaic_0001>
module attributes {stable_mosaic.version = 11 : i64} {
  func.func @_up_kernel(%arg0: i32, %arg1: i32, %arg2: memref<1x4x256xbf16, #tpu.memory_space<vmem>>, %arg3: memref<256x1024xbf16, #tpu.memory_space<vmem>>, %arg4: memref<1x4x1024xf32, #tpu.memory_space<vmem>>) attributes {dimension_semantics = [#tpu.dimension_semantics<parallel>, #tpu.dimension_semantics<parallel>], iteration_bounds = array<i64: 2, 1>, scalar_prefetch = 0 : i64, scratch_operands = 0 : i64, tpu.core_type = #tpu.core_type<tc>, window_params = [{transform_indices = @transform_0, window_bounds = array<i64: 1, 4, 256>}, {pipeline_mode = #tpu.pipeline_mode<synchronous>, transform_indices = @transform_1, window_bounds = array<i64: 256, 1024>}, {transform_indices = @transform_2, window_bounds = array<i64: 1, 4, 1024>}]} {
    %c0 = arith.constant 0 : index
    %c0_0 = arith.constant 0 : index
    %c0_1 = arith.constant 0 : index
    %0 = vector.load %arg2[%c0, %c0_0, %c0_1] : memref<1x4x256xbf16, #tpu.memory_space<vmem>>, vector<1x4x256xbf16>
    %1 = vector.shape_cast %0 : vector<1x4x256xbf16> to vector<4x256xbf16>
    %c0_2 = arith.constant 0 : index
    %c0_3 = arith.constant 0 : index
    %2 = vector.load %arg3[%c0_2, %c0_3] : memref<256x1024xbf16, #tpu.memory_space<vmem>>, vector<256x1024xbf16>
    %cst = arith.constant dense<0.000000e+00> : vector<4x1024xf32>
    %3 = tpu.matmul %1, %2, %cst {dimension_numbers = #tpu.dot_dimension_numbers<[1], [0], [0], [1], [0, 0, 1, 1], [], []>} : vector<4x256xbf16>, vector<256x1024xbf16>, vector<4x1024xf32> -> vector<4x1024xf32>
    %c0_4 = arith.constant 0 : index
    %c0_5 = arith.constant 0 : index
    %c0_6 = arith.constant 0 : index
    %4 = vector.load %arg4[%c0_4, %c0_5, %c0_6] : memref<1x4x1024xf32, #tpu.memory_space<vmem>>, vector<1x4x1024xf32>
    %5 = vector.shape_cast %4 : vector<1x4x1024xf32> to vector<4x1024xf32>
    %6 = vector.shape_cast %3 : vector<4x1024xf32> to vector<1x4x1024xf32>
    tpu.vector_store %arg4[%c0_4, %c0_5, %c0_6], %6 {strides = array<i32>} : memref<1x4x1024xf32, #tpu.memory_space<vmem>>, vector<1x4x1024xf32>,
    return
  }
  func.func @transform_0(%arg0: i32, %arg1: i32) -> (i32, i32, i32) {
    %c0_i32 = arith.constant 0 : i32
    %c0_i32_0 = arith.constant 0 : i32
    return %arg0, %arg1, %c0_i32 : i32, i32, i32
  }
  func.func @transform_1(%arg0: i32, %arg1: i32) -> (i32, i32) {
    %c0_i32 = arith.constant 0 : i32
    %c0_i32_0 = arith.constant 0 : i32
    %c0_i32_1 = arith.constant 0 : i32
    return %c0_i32, %c0_i32_0 : i32, i32
  }
  func.func @transform_2(%arg0: i32, %arg1: i32) -> (i32, i32, i32) {
    %c0_i32 = arith.constant 0 : i32
    %c0_i32_0 = arith.constant 0 : i32
    return %arg0, %arg1, %c0_i32 : i32, i32, i32
  }
}

</mosaic_0001>

<llo_original>
// kernel: tpu_custom_call.1
$region0: #{tpu_custom_call.1}
  #allocation0 [shape = 'u32[]', space=smem, size = 0x4, offset = 0x4, fixed_abs, tag = 'smem constant byte address 0x4 - core index']
  #allocation1 [shape = 'u32[144,128]{1,0:T(1,128)}', space=vmem, size = 0x12000, scoped, tag = 'internal scratch']
  %s0 = inlined_call_operand.hbm [shape: bf16[2,4,256], index: 0, kind: input, shape index: {}]
  %s1 = inlined_call_operand.hbm [shape: bf16[256,1024], index: 1, kind: input, shape index: {}]
  %s2 = inlined_call_operand.hbm [shape: f32[2,4,1024], index: 2, kind: output, shape index: {}]
  %s3 = sld [smem:[#allocation0]]
  $region49: #{tpu_custom_call.1} parent=0
    _
  %s5 = ssub.s32 1, %s3
  %s6 = scalar_select 0, %s5, %s3
  $region1: #{tpu_custom_call.1} parent=0
    #allocation2 [shape = 'u8[4096]{0}', space=vmem, size = 0x1000, scoped, tag = 'input window, operand 0']
    #allocation3 [shape = 's32[2]{0}', space=sflag, size = 0x8, scoped, tag = 'scoped memory for tpu_custom_call.1']
    #allocation4 [shape = 's32[2]{0}', space=sflag, size = 0x8, scoped, tag = 'scoped memory for tpu_custom_call.1']
    #allocation5 [shape = 'u8[524288]{0}', space=vmem, size = 0x80000, scoped, tag = 'input window, operand 1, single buffered']
    #allocation6 [shape = 's32[1]{0}', space=sflag, size = 0x4, scoped, tag = 'scoped memory for tpu_custom_call.1']
    #allocation7 [shape = 'u8[32768]{0}', space=vmem, size = 0x8000, scoped, tag = 'output window, operand 0']
    %7 = vsyncpa [#allocation3], 0
    %s8 = scalar_lea.sflag [#allocation3], 1
    %9 = vsyncpa %s8, 0
    %10 = vsyncpa [#allocation6], 0
    %11 = vsyncpa [#allocation4], 0
    %s12 = scalar_lea.sflag [#allocation4], 1
    %13 = vsyncpa %s12, 0
    loop: start=0, step=1, limit=4
    $region2: #{tpu_custom_call.1} parent=1 // loop_pre_header
      _
    $region3: #{tpu_custom_call.1} parent=1 // loop_header
      %s15 = sphi 0, %s19
      %p16 = scmp.ge.s32.totalorder %s15, 4
      %s22 = sphi 0, %s34
      %s23 = sphi 0, %s30
      %s24 = sphi 0, %s22
      %s25 = sphi 0, %s23
      %s26 = sphi 0, %s24
      %s27 = sphi 0, %s25
      %s39 = sphi 0, %s41
      %s42 = sphi 0, %s39
      %s43 = sphi 0, %s42
      %s59 = sphi 0, %s43
      %s63 = sphi 0, %s63
      %s65 = sphi 0, %s63
      %s66 = sphi 0, %s65
      %s80 = sphi 0, %s66
      %s88 = sphi 0, %s90
      %s91 = sphi 0, %s88
      %s92 = sphi 0, %s91
      %s108 = sphi 0, %s92
    $region4: #{tpu_custom_call.1} parent=1 // loop_header_branch
      %18 = sbr.rel (%p16) target = $region8
    $region5: #{tpu_custom_call.1} parent=1 // loop_body
      %s20 = ssub.s32 %s15, 1
      %s21 = ssub.s32 %s15, 2
      %s28 = sadd.s32 1, %s23
      %p29 = scmp.ge.s32.totalorder %s28, 1
      %s30 = scalar_select %p29, 0, %s28
      %s31 = sadd.s32 1, %s22
      %s32 = scalar_select %p29, %s31, %s22
      %p33 = scmp.ge.s32.totalorder %s32, 2
      %s34 = scalar_select %p33, 0, %s32
      %s35 = ssub.s32 %s22, %s34
      %s36 = ssub.s32 %s23, %s30
      %s37 = sor.u32 %s35, %s36
      %p38 = scmp.eq.s32.totalorder %s37, 0
      %s40 = sadd.s32 %s39, 1
      %s41 = scalar_select %p38, %s39, %s40
      %p44 = pneg %p38
      %p45 = scmp.eq.s32.totalorder %s15, 1
      %p46 = por %p44, %p45
      %p47 = scmp.ne.s32.totalorder %s39, %s42
      %p48 = scmp.eq.s32.totalorder %s15, 0
      %p49 = por %p47, %p48
      %p50 = scmp.ne.s32.totalorder %s39, %s42
      %p51 = scmp.eq.s32.totalorder %s20, 1
      %p52 = por %p50, %p51
      %p53 = scmp.ne.s32.totalorder %s42, %s43
      %p54 = scmp.eq.s32.totalorder %s20, 0
      %p55 = por %p53, %p54
      %p56 = scmp.ne.s32.totalorder %s42, %s43
      %p57 = scmp.eq.s32.totalorder %s21, 1
      %p58 = por %p56, %p57
      %p60 = scmp.ne.s32.totalorder %s43, %s59
      %p61 = scmp.eq.s32.totalorder %s21, 0
      %p62 = por %p60, %p61
      %s64 = sadd.s32 %s63, 1
      %p67 = scmp.eq.s32.totalorder %s15, 1
      %p68 = scmp.ne.s32.totalorder %s63, %s65
      %p69 = scmp.eq.s32.totalorder %s15, 0
      %p70 = por %p68, %p69
      %p71 = scmp.ne.s32.totalorder %s63, %s65
      %p72 = scmp.eq.s32.totalorder %s20, 1
      %p73 = por %p71, %p72
      %p74 = scmp.ne.s32.totalorder %s65, %s66
      %p75 = scmp.eq.s32.totalorder %s20, 0
      %p76 = por %p74, %p75
      %p77 = scmp.ne.s32.totalorder %s65, %s66
      %p78 = scmp.eq.s32.totalorder %s21, 1
      %p79 = por %p77, %p78
      %p81 = scmp.ne.s32.totalorder %s66, %s80
      %p82 = scmp.eq.s32.totalorder %s21, 0
      %p83 = por %p81, %p82
      %s84 = ssub.s32 %s22, %s34
      %s85 = ssub.s32 %s23, %s30
      %s86 = sor.u32 %s84, %s85
      %p87 = scmp.eq.s32.totalorder %s86, 0
      %s89 = sadd.s32 %s88, 1
      %s90 = scalar_select %p87, %s88, %s89
      %p93 = pneg %p87
      %p94 = scmp.eq.s32.totalorder %s15, 1
      %p95 = por %p93, %p94
      %p96 = scmp.ne.s32.totalorder %s88, %s91
      %p97 = scmp.eq.s32.totalorder %s15, 0
      %p98 = por %p96, %p97
      %p99 = scmp.ne.s32.totalorder %s88, %s91
      %p100 = scmp.eq.s32.totalorder %s20, 1
      %p101 = por %p99, %p100
      %p102 = scmp.ne.s32.totalorder %s91, %s92
      %p103 = scmp.eq.s32.totalorder %s20, 0
      %p104 = por %p102, %p103
      %p105 = scmp.ne.s32.totalorder %s91, %s92
      %p106 = scmp.eq.s32.totalorder %s21, 1
      %p107 = por %p105, %p106
      %p109 = scmp.ne.s32.totalorder %s92, %s108
      %p110 = scmp.eq.s32.totalorder %s21, 0
      %p111 = por %p109, %p110
      %p112 = scmp.le.s32.totalorder 1, %s15
      %p113 = scmp.lt.s32.totalorder %s15, 3
      %p114 = pnand %p112, %p113
      %p115 = pneg %p114
      // Predicated region
      $region9: #{tpu_custom_call.1} parent=5 // pred_check
        _
      $region10: #{tpu_custom_call.1} parent=5 // pred_check_branch
        %117 = sbr.rel (%p114) target = $region12
      $region11: #{tpu_custom_call.1} parent=5 // pred_region
        %s118 = ssub.s32 %s15, 1
        // Predicated region
        $region13: #{tpu_custom_call.1} parent=11 // pred_check
          %p119 = pneg %p76
        $region14: #{tpu_custom_call.1} parent=11 // pred_check_branch
          %121 = sbr.rel (%p119) target = $region16
        $region15: #{tpu_custom_call.1} parent=11 // pred_region
          %s123 = ssub.s32 16384, 16384
          %124 = vsyncadd [#allocation6], %s123
          %s125 = sshll.u32 [#allocation5], 4
          %s126 = int_to_ptr.vmem [resolvable:$true] %s125
          %131 = dma.hbm_to_vmem [thread:$0]  %s1, 16384, %s126, [#allocation6], 512, 512, 32
        $region16: #{tpu_custom_call.1} parent=11 // pred_fallthru
          _
      $region12: #{tpu_custom_call.1} parent=5 // pred_fallthru
        _
      %p132 = scmp.lt.s32.totalorder %s15, 2
      // Predicated region
      $region17: #{tpu_custom_call.1} parent=5 // pred_check
        %p133 = pneg %p132
      $region18: #{tpu_custom_call.1} parent=5 // pred_check_branch
        %135 = sbr.rel (%p133) target = $region20
      $region19: #{tpu_custom_call.1} parent=5 // pred_region
        // Predicated region
        $region21: #{tpu_custom_call.1} parent=19 // pred_check
          %p136 = pneg %p49
        $region22: #{tpu_custom_call.1} parent=19 // pred_check_branch
          %138 = sbr.rel (%p136) target = $region24
        $region23: #{tpu_custom_call.1} parent=19 // pred_region
          %s139 = sand.u32 %s39, 1
          %s140 = scalar_lea.sflag [#allocation3], %s139
          %s141 = sand.u32 %s39, 1
          %s142 = smul.addr %s141, 4
          %s143 = scalar_lea.vmem [#allocation2], %s142
          %s145 = ssub.s32 64, 64
          %146 = vsyncadd %s140, %s145
          %s147 = smul.addr %s23, 2
          %s148 = smul.addr %s22, 2
          %s149 = sadd.s32 %s147, %s148
          %s150 = smul.addr %s149, 32
          %s151 = scalar_lea.hbm %s0, %s150
          %s153 = sshll.u32 %s143, 4
          %s154 = int_to_ptr.vmem [resolvable:$true] %s153
          %156 = dma.hbm_to_vmem [thread:$0]  %s151, 64, %s154, %s140
        $region24: #{tpu_custom_call.1} parent=19 // pred_fallthru
          _
      $region20: #{tpu_custom_call.1} parent=5 // pred_fallthru
        _
      %p157 = scmp.le.s32.totalorder 1, %s15
      %p158 = scmp.lt.s32.totalorder %s15, 3
      %p159 = pnand %p157, %p158
      %p160 = pneg %p159
      // Predicated region
      $region25: #{tpu_custom_call.1} parent=5 // pred_check
        _
      $region26: #{tpu_custom_call.1} parent=5 // pred_check_branch
        %162 = sbr.rel (%p159) target = $region28
      $region27: #{tpu_custom_call.1} parent=5 // pred_region
        %s163 = ssub.s32 %s15, 1
        %s164 = sand.u32 %s42, 1
        %s165 = scalar_lea.sflag [#allocation3], %s164
        %s166 = sand.u32 %s42, 1
        %s167 = smul.addr %s166, 4
        %s168 = scalar_lea.vmem [#allocation2], %s167
        // Predicated region
        $region29: #{tpu_custom_call.1} parent=27 // pred_check
          %p169 = pneg %p55
        $region30: #{tpu_custom_call.1} parent=27 // pred_check_branch
          %171 = sbr.rel (%p169) target = $region32
        $region31: #{tpu_custom_call.1} parent=27 // pred_region
          %172 = dma.done %s165, 64
        $region32: #{tpu_custom_call.1} parent=27 // pred_fallthru
          _
        // Predicated region
        $region33: #{tpu_custom_call.1} parent=27 // pred_check
          %p173 = pneg %p76
        $region34: #{tpu_custom_call.1} parent=27 // pred_check_branch
          %175 = sbr.rel (%p173) target = $region36
        $region35: #{tpu_custom_call.1} parent=27 // pred_region
          %176 = dma.done [#allocation6], 16384
        $region36: #{tpu_custom_call.1} parent=27 // pred_fallthru
          _
        %s177 = sand.u32 %s42, 1
        %s178 = scalar_lea.sflag [#allocation3], %s177
        %s179 = sand.u32 %s42, 1
        %s180 = smul.addr %s179, 4
        %s181 = scalar_lea.vmem [#allocation2], %s180
        %p182 = pneg %p55
        %p183 = pneg %p52
        %p184 = pneg %p76
        %p185 = pneg %p73
        %p186 = pneg %p104
        %p187 = pneg %p101
        %s188 = sand.u32 %s91, 1
        %s189 = scalar_lea.sflag [#allocation4], %s188
        %s190 = sand.u32 %s91, 1
        %s191 = smul.addr %s190, 32
        %s192 = scalar_lea.vmem [#allocation7], %s191
        %v193 = vld [vmem:[%s168] sm:$0xf]
        %v194 = vld [vmem:[#allocation5] sm:$0xff]
        %v195 = vld [vmem:[#allocation5 + $0x8] sm:$0xff]
        %v196 = vld [vmem:[#allocation5 + $0x10] sm:$0xff]
        %v197 = vld [vmem:[#allocation5 + $0x18] sm:$0xff]
        %v198 = vld [vmem:[#allocation5 + $0x20] sm:$0xff]
        %v199 = vld [vmem:[#allocation5 + $0x28] sm:$0xff]
        %v200 = vld [vmem:[#allocation5 + $0x30] sm:$0xff]
        %v201 = vld [vmem:[#allocation5 + $0x38] sm:$0xff]
        %v202 = vld [vmem:[#allocation5 + $0x40] sm:$0xff]
        %v203 = vld [vmem:[#allocation5 + $0x48] sm:$0xff]
        %v204 = vld [vmem:[#allocation5 + $0x50] sm:$0xff]
        %v205 = vld [vmem:[#allocation5 + $0x58] sm:$0xff]
        %v206 = vld [vmem:[#allocation5 + $0x60] sm:$0xff]
        %v207 = vld [vmem:[#allocation5 + $0x68] sm:$0xff]
        %v208 = vld [vmem:[#allocation5 + $0x70] sm:$0xff]
        %v209 = vld [vmem:[#allocation5 + $0x78] sm:$0xff]
        %v210 = vld [vmem:[#allocation5 + $0x80] sm:$0xff]
        %v211 = vld [vmem:[#allocation5 + $0x88] sm:$0xff]
        %v212 = vld [vmem:[#allocation5 + $0x90] sm:$0xff]
        %v213 = vld [vmem:[#allocation5 + $0x98] sm:$0xff]
        %v214 = vld [vmem:[#allocation5 + $0xa0] sm:$0xff]
        %v215 = vld [vmem:[#allocation5 + $0xa8] sm:$0xff]
        %v216 = vld [vmem:[#allocation5 + $0xb0] sm:$0xff]
        %v217 = vld [vmem:[#allocation5 + $0xb8] sm:$0xff]
        %v218 = vld [vmem:[#allocation5 + $0xc0] sm:$0xff]
        %v219 = vld [vmem:[#allocation5 + $0xc8] sm:$0xff]
        %v220 = vld [vmem:[#allocation5 + $0xd0] sm:$0xff]
        %v221 = vld [vmem:[#allocation5 + $0xd8] sm:$0xff]
        %v222 = vld [vmem:[#allocation5 + $0xe0] sm:$0xff]
        %v223 = vld [vmem:[#allocation5 + $0xe8] sm:$0xff]
        %v224 = vld [vmem:[#allocation5 + $0xf0] sm:$0xff]
        %v225 = vld [vmem:[#allocation5 + $0xf8] sm:$0xff]
        %v226 = vld [vmem:[#allocation5 + $0x100] sm:$0xff]
        %v227 = vld [vmem:[#allocation5 + $0x108] sm:$0xff]
        %v228 = vld [vmem:[#allocation5 + $0x110] sm:$0xff]
        %v229 = vld [vmem:[#allocation5 + $0x118] sm:$0xff]
        %v230 = vld [vmem:[#allocation5 + $0x120] sm:$0xff]
        %v231 = vld [vmem:[#allocation5 + $0x128] sm:$0xff]
        %v232 = vld [vmem:[#allocation5 + $0x130] sm:$0xff]
        %v233 = vld [vmem:[#allocation5 + $0x138] sm:$0xff]
        %v234 = vld [vmem:[#allocation5 + $0x140] sm:$0xff]
        %v235 = vld [vmem:[#allocation5 + $0x148] sm:$0xff]
        %v236 = vld [vmem:[#allocation5 + $0x150] sm:$0xff]
        %v237 = vld [vmem:[#allocation5 + $0x158] sm:$0xff]
        %v238 = vld [vmem:[#allocation5 + $0x160] sm:$0xff]
        %v239 = vld [vmem:[#allocation5 + $0x168] sm:$0xff]
        %v240 = vld [vmem:[#allocation5 + $0x170] sm:$0xff]
        %v241 = vld [vmem:[#allocation5 + $0x178] sm:$0xff]
        %v242 = vld [vmem:[#allocation5 + $0x180] sm:$0xff]
        %v243 = vld [vmem:[#allocation5 + $0x188] sm:$0xff]
        %v244 = vld [vmem:[#allocation5 + $0x190] sm:$0xff]
        %v245 = vld [vmem:[#allocation5 + $0x198] sm:$0xff]
        %v246 = vld [vmem:[#allocation5 + $0x1a0] sm:$0xff]
        %v247 = vld [vmem:[#allocation5 + $0x1a8] sm:$0xff]
        %v248 = vld [vmem:[#allocation5 + $0x1b0] sm:$0xff]
        %v249 = vld [vmem:[#allocation5 + $0x1b8] sm:$0xff]
        %v250 = vld [vmem:[#allocation5 + $0x1c0] sm:$0xff]
        %v251 = vld [vmem:[#allocation5 + $0x1c8] sm:$0xff]
        %v252 = vld [vmem:[#allocation5 + $0x1d0] sm:$0xff]
        %v253 = vld [vmem:[#allocation5 + $0x1d8] sm:$0xff]
        %v254 = vld [vmem:[#allocation5 + $0x1e0] sm:$0xff]
        %v255 = vld [vmem:[#allocation5 + $0x1e8] sm:$0xff]
        %v256 = vld [vmem:[#allocation5 + $0x1f0] sm:$0xff]
        %v257 = vld [vmem:[#allocation5 + $0x1f8] sm:$0xff]
        %v258 = vld [vmem:[#allocation5 + $0x200] sm:$0xff]
        %v259 = vld [vmem:[#allocation5 + $0x208] sm:$0xff]
        %v260 = vld [vmem:[#allocation5 + $0x210] sm:$0xff]
        %v261 = vld [vmem:[#allocation5 + $0x218] sm:$0xff]
        %v262 = vld [vmem:[#allocation5 + $0x220] sm:$0xff]
        %v263 = vld [vmem:[#allocation5 + $0x228] sm:$0xff]
        %v264 = vld [vmem:[#allocation5 + $0x230] sm:$0xff]
        %v265 = vld [vmem:[#allocation5 + $0x238] sm:$0xff]
        %v266 = vld [vmem:[#allocation5 + $0x240] sm:$0xff]
        %v267 = vld [vmem:[#allocation5 + $0x248] sm:$0xff]
        %v268 = vld [vmem:[#allocation5 + $0x250] sm:$0xff]
        %v269 = vld [vmem:[#allocation5 + $0x258] sm:$0xff]
        %v270 = vld [vmem:[#allocation5 + $0x260] sm:$0xff]
        %v271 = vld [vmem:[#allocation5 + $0x268] sm:$0xff]
        %v272 = vld [vmem:[#allocation5 + $0x270] sm:$0xff]
        %v273 = vld [vmem:[#allocation5 + $0x278] sm:$0xff]
        %v274 = vld [vmem:[#allocation5 + $0x280] sm:$0xff]
        %v275 = vld [vmem:[#allocation5 + $0x288] sm:$0xff]
        %v276 = vld [vmem:[#allocation5 + $0x290] sm:$0xff]
        %v277 = vld [vmem:[#allocation5 + $0x298] sm:$0xff]
        %v278 = vld [vmem:[#allocation5 + $0x2a0] sm:$0xff]
        %v279 = vld [vmem:[#allocation5 + $0x2a8] sm:$0xff]
        %v280 = vld [vmem:[#allocation5 + $0x2b0] sm:$0xff]
        %v281 = vld [vmem:[#allocation5 + $0x2b8] sm:$0xff]
        %v282 = vld [vmem:[#allocation5 + $0x2c0] sm:$0xff]
        %v283 = vld [vmem:[#allocation5 + $0x2c8] sm:$0xff]
        %v284 = vld [vmem:[#allocation5 + $0x2d0] sm:$0xff]
        %v285 = vld [vmem:[#allocation5 + $0x2d8] sm:$0xff]
        %v286 = vld [vmem:[#allocation5 + $0x2e0] sm:$0xff]
        %v287 = vld [vmem:[#allocation5 + $0x2e8] sm:$0xff]
        %v288 = vld [vmem:[#allocation5 + $0x2f0] sm:$0xff]
        %v289 = vld [vmem:[#allocation5 + $0x2f8] sm:$0xff]
        %v290 = vld [vmem:[#allocation5 + $0x300] sm:$0xff]
        %v291 = vld [vmem:[#allocation5 + $0x308] sm:$0xff]
        %v292 = vld [vmem:[#allocation5 + $0x310] sm:$0xff]
        %v293 = vld [vmem:[#allocation5 + $0x318] sm:$0xff]
        %v294 = vld [vmem:[#allocation5 + $0x320] sm:$0xff]
        %v295 = vld [vmem:[#allocation5 + $0x328] sm:$0xff]
        %v296 = vld [vmem:[#allocation5 + $0x330] sm:$0xff]
        %v297 = vld [vmem:[#allocation5 + $0x338] sm:$0xff]
        %v298 = vld [vmem:[#allocation5 + $0x340] sm:$0xff]
        %v299 = vld [vmem:[#allocation5 + $0x348] sm:$0xff]
        %v300 = vld [vmem:[#allocation5 + $0x350] sm:$0xff]
        %v301 = vld [vmem:[#allocation5 + $0x358] sm:$0xff]
        %v302 = vld [vmem:[#allocation5 + $0x360] sm:$0xff]
        %v303 = vld [vmem:[#allocation5 + $0x368] sm:$0xff]
        %v304 = vld [vmem:[#allocation5 + $0x370] sm:$0xff]
        %v305 = vld [vmem:[#allocation5 + $0x378] sm:$0xff]
        %v306 = vld [vmem:[#allocation5 + $0x380] sm:$0xff]
        %v307 = vld [vmem:[#allocation5 + $0x388] sm:$0xff]
        %v308 = vld [vmem:[#allocation5 + $0x390] sm:$0xff]
        %v309 = vld [vmem:[#allocation5 + $0x398] sm:$0xff]
        %v310 = vld [vmem:[#allocation5 + $0x3a0] sm:$0xff]
        %v311 = vld [vmem:[#allocation5 + $0x3a8] sm:$0xff]
        %v312 = vld [vmem:[#allocation5 + $0x3b0] sm:$0xff]
        %v313 = vld [vmem:[#allocation5 + $0x3b8] sm:$0xff]
        %v314 = vld [vmem:[#allocation5 + $0x3c0] sm:$0xff]
        %v315 = vld [vmem:[#allocation5 + $0x3c8] sm:$0xff]
        %v316 = vld [vmem:[#allocation5 + $0x3d0] sm:$0xff]
        %v317 = vld [vmem:[#allocation5 + $0x3d8] sm:$0xff]
        %v318 = vld [vmem:[#allocation5 + $0x3e0] sm:$0xff]
        %v319 = vld [vmem:[#allocation5 + $0x3e8] sm:$0xff]
        %v320 = vld [vmem:[#allocation5 + $0x3f0] sm:$0xff]
        %v321 = vld [vmem:[#allocation5 + $0x3f8] sm:$0xff]
        %v324 = vunpack.c.l.s4 1983009808
        %v325 = vunpack.c.0.s8 %v324
        %v326 = vlaneseq
        %v327 = vshrl.u32 %v326, 7
        %v328 = vsub.s32 %v325, %v327
        %v329 = vrot.slane %v193, %v328
        %v330 = vcombine.high %v329, %v329
        %v461 = vunpack.c.l.b16 %v194
        %v462 = vunpack.c.h.b16 %v194
        %v463 = vunpack.c.l.b16 %v195
        %v464 = vunpack.c.h.b16 %v195
        %v465 = vunpack.c.l.b16 %v196
        %v466 = vunpack.c.h.b16 %v196
        %v467 = vunpack.c.l.b16 %v197
        %v468 = vunpack.c.h.b16 %v197
        %v469 = vunpack.c.l.b16 %v198
        %v470 = vunpack.c.h.b16 %v198
        %v471 = vunpack.c.l.b16 %v199
        %v472 = vunpack.c.h.b16 %v199
        %v473 = vunpack.c.l.b16 %v200
        %v474 = vunpack.c.h.b16 %v200
        %v475 = vunpack.c.l.b16 %v201
        %v476 = vunpack.c.h.b16 %v201
        %v477 = vunpack.c.l.b16 %v202
        %v478 = vunpack.c.h.b16 %v202
        %v479 = vunpack.c.l.b16 %v203
        %v480 = vunpack.c.h.b16 %v203
        %v481 = vunpack.c.l.b16 %v204
        %v482 = vunpack.c.h.b16 %v204
        %v483 = vunpack.c.l.b16 %v205
        %v484 = vunpack.c.h.b16 %v205
        %v485 = vunpack.c.l.b16 %v206
        %v486 = vunpack.c.h.b16 %v206
        %v487 = vunpack.c.l.b16 %v207
        %v488 = vunpack.c.h.b16 %v207
        %v489 = vunpack.c.l.b16 %v208
        %v490 = vunpack.c.h.b16 %v208
        %v491 = vunpack.c.l.b16 %v209
        %v492 = vunpack.c.h.b16 %v209
        %v493 = vunpack.c.l.b16 %v210
        %v494 = vunpack.c.h.b16 %v210
        %v495 = vunpack.c.l.b16 %v211
        %v496 = vunpack.c.h.b16 %v211
        %v497 = vunpack.c.l.b16 %v212
        %v498 = vunpack.c.h.b16 %v212
        %v499 = vunpack.c.l.b16 %v213
        %v500 = vunpack.c.h.b16 %v213
        %v501 = vunpack.c.l.b16 %v214
        %v502 = vunpack.c.h.b16 %v214
        %v503 = vunpack.c.l.b16 %v215
        %v504 = vunpack.c.h.b16 %v215
        %v505 = vunpack.c.l.b16 %v216
        %v506 = vunpack.c.h.b16 %v216
        %v507 = vunpack.c.l.b16 %v217
        %v508 = vunpack.c.h.b16 %v217
        %v509 = vunpack.c.l.b16 %v218
        %v510 = vunpack.c.h.b16 %v218
        %v511 = vunpack.c.l.b16 %v219
        %v512 = vunpack.c.h.b16 %v219
        %v513 = vunpack.c.l.b16 %v220
        %v514 = vunpack.c.h.b16 %v220
        %v515 = vunpack.c.l.b16 %v221
        %v516 = vunpack.c.h.b16 %v221
        %v517 = vunpack.c.l.b16 %v222
        %v518 = vunpack.c.h.b16 %v222
        %v519 = vunpack.c.l.b16 %v223
        %v520 = vunpack.c.h.b16 %v223
        %v521 = vunpack.c.l.b16 %v224
        %v522 = vunpack.c.h.b16 %v224
        %v523 = vunpack.c.l.b16 %v225
        %v524 = vunpack.c.h.b16 %v225
        %v525 = vunpack.c.l.b16 %v226
        %v526 = vunpack.c.h.b16 %v226
        %v527 = vunpack.c.l.b16 %v227
        %v528 = vunpack.c.h.b16 %v227
        %v529 = vunpack.c.l.b16 %v228
        %v530 = vunpack.c.h.b16 %v228
        %v531 = vunpack.c.l.b16 %v229
        %v532 = vunpack.c.h.b16 %v229
        %v533 = vunpack.c.l.b16 %v230
        %v534 = vunpack.c.h.b16 %v230
        %v535 = vunpack.c.l.b16 %v231
        %v536 = vunpack.c.h.b16 %v231
        %v537 = vunpack.c.l.b16 %v232
        %v538 = vunpack.c.h.b16 %v232
        %v539 = vunpack.c.l.b16 %v233
        %v540 = vunpack.c.h.b16 %v233
        %v541 = vunpack.c.l.b16 %v234
        %v542 = vunpack.c.h.b16 %v234
        %v543 = vunpack.c.l.b16 %v235
        %v544 = vunpack.c.h.b16 %v235
        %v545 = vunpack.c.l.b16 %v236
        %v546 = vunpack.c.h.b16 %v236
        %v547 = vunpack.c.l.b16 %v237
        %v548 = vunpack.c.h.b16 %v237
        %v549 = vunpack.c.l.b16 %v238
        %v550 = vunpack.c.h.b16 %v238
        %v551 = vunpack.c.l.b16 %v239
        %v552 = vunpack.c.h.b16 %v239
        %v553 = vunpack.c.l.b16 %v240
        %v554 = vunpack.c.h.b16 %v240
        %v555 = vunpack.c.l.b16 %v241
        %v556 = vunpack.c.h.b16 %v241
        %v557 = vunpack.c.l.b16 %v242
        %v558 = vunpack.c.h.b16 %v242
        %v559 = vunpack.c.l.b16 %v243
        %v560 = vunpack.c.h.b16 %v243
        %v561 = vunpack.c.l.b16 %v244
        %v562 = vunpack.c.h.b16 %v244
        %v563 = vunpack.c.l.b16 %v245
        %v564 = vunpack.c.h.b16 %v245
        %v565 = vunpack.c.l.b16 %v246
        %v566 = vunpack.c.h.b16 %v246
        %v567 = vunpack.c.l.b16 %v247
        %v568 = vunpack.c.h.b16 %v247
        %v569 = vunpack.c.l.b16 %v248
        %v570 = vunpack.c.h.b16 %v248
        %v571 = vunpack.c.l.b16 %v249
        %v572 = vunpack.c.h.b16 %v249
        %v573 = vunpack.c.l.b16 %v250
        %v574 = vunpack.c.h.b16 %v250
        %v575 = vunpack.c.l.b16 %v251
        %v576 = vunpack.c.h.b16 %v251
        %v577 = vunpack.c.l.b16 %v252
        %v578 = vunpack.c.h.b16 %v252
        %v579 = vunpack.c.l.b16 %v253
        %v580 = vunpack.c.h.b16 %v253
        %v581 = vunpack.c.l.b16 %v254
        %v582 = vunpack.c.h.b16 %v254
        %v583 = vunpack.c.l.b16 %v255
        %v584 = vunpack.c.h.b16 %v255
        %v585 = vunpack.c.l.b16 %v256
        %v586 = vunpack.c.h.b16 %v256
        %v587 = vunpack.c.l.b16 %v257
        %v588 = vunpack.c.h.b16 %v257
        %v589 = vunpack.c.l.b16 %v258
        %v590 = vunpack.c.h.b16 %v258
        %v591 = vunpack.c.l.b16 %v259
        %v592 = vunpack.c.h.b16 %v259
        %v593 = vunpack.c.l.b16 %v260
        %v594 = vunpack.c.h.b16 %v260
        %v595 = vunpack.c.l.b16 %v261
        %v596 = vunpack.c.h.b16 %v261
        %v597 = vunpack.c.l.b16 %v262
        %v598 = vunpack.c.h.b16 %v262
        %v599 = vunpack.c.l.b16 %v263
        %v600 = vunpack.c.h.b16 %v263
        %v601 = vunpack.c.l.b16 %v264
        %v602 = vunpack.c.h.b16 %v264
        %v603 = vunpack.c.l.b16 %v265
        %v604 = vunpack.c.h.b16 %v265
        %v605 = vunpack.c.l.b16 %v266
        %v606 = vunpack.c.h.b16 %v266
        %v607 = vunpack.c.l.b16 %v267
        %v608 = vunpack.c.h.b16 %v267
        %v609 = vunpack.c.l.b16 %v268
        %v610 = vunpack.c.h.b16 %v268
        %v611 = vunpack.c.l.b16 %v269
        %v612 = vunpack.c.h.b16 %v269
        %v613 = vunpack.c.l.b16 %v270
        %v614 = vunpack.c.h.b16 %v270
        %v615 = vunpack.c.l.b16 %v271
        %v616 = vunpack.c.h.b16 %v271
        %v617 = vunpack.c.l.b16 %v272
        %v618 = vunpack.c.h.b16 %v272
        %v619 = vunpack.c.l.b16 %v273
        %v620 = vunpack.c.h.b16 %v273
        %v621 = vunpack.c.l.b16 %v274
        %v622 = vunpack.c.h.b16 %v274
        %v623 = vunpack.c.l.b16 %v275
        %v624 = vunpack.c.h.b16 %v275
        %v625 = vunpack.c.l.b16 %v276
        %v626 = vunpack.c.h.b16 %v276
        %v627 = vunpack.c.l.b16 %v277
        %v628 = vunpack.c.h.b16 %v277
        %v629 = vunpack.c.l.b16 %v278
        %v630 = vunpack.c.h.b16 %v278
        %v631 = vunpack.c.l.b16 %v279
        %v632 = vunpack.c.h.b16 %v279
        %v633 = vunpack.c.l.b16 %v280
        %v634 = vunpack.c.h.b16 %v280
        %v635 = vunpack.c.l.b16 %v281
        %v636 = vunpack.c.h.b16 %v281
        %v637 = vunpack.c.l.b16 %v282
        %v638 = vunpack.c.h.b16 %v282
        %v639 = vunpack.c.l.b16 %v283
        %v640 = vunpack.c.h.b16 %v283
        %v641 = vunpack.c.l.b16 %v284
        %v642 = vunpack.c.h.b16 %v284
        %v643 = vunpack.c.l.b16 %v285
        %v644 = vunpack.c.h.b16 %v285
        %v645 = vunpack.c.l.b16 %v286
        %v646 = vunpack.c.h.b16 %v286
        %v647 = vunpack.c.l.b16 %v287
        %v648 = vunpack.c.h.b16 %v287
        %v649 = vunpack.c.l.b16 %v288
        %v650 = vunpack.c.h.b16 %v288
        %v651 = vunpack.c.l.b16 %v289
        %v652 = vunpack.c.h.b16 %v289
        %v653 = vunpack.c.l.b16 %v290
        %v654 = vunpack.c.h.b16 %v290
        %v655 = vunpack.c.l.b16 %v291
        %v656 = vunpack.c.h.b16 %v291
        %v657 = vunpack.c.l.b16 %v292
        %v658 = vunpack.c.h.b16 %v292
        %v659 = vunpack.c.l.b16 %v293
        %v660 = vunpack.c.h.b16 %v293
        %v661 = vunpack.c.l.b16 %v294
        %v662 = vunpack.c.h.b16 %v294
        %v663 = vunpack.c.l.b16 %v295
        %v664 = vunpack.c.h.b16 %v295
        %v665 = vunpack.c.l.b16 %v296
        %v666 = vunpack.c.h.b16 %v296
        %v667 = vunpack.c.l.b16 %v297
        %v668 = vunpack.c.h.b16 %v297
        %v669 = vunpack.c.l.b16 %v298
        %v670 = vunpack.c.h.b16 %v298
        %v671 = vunpack.c.l.b16 %v299
        %v672 = vunpack.c.h.b16 %v299
        %v673 = vunpack.c.l.b16 %v300
        %v674 = vunpack.c.h.b16 %v300
        %v675 = vunpack.c.l.b16 %v301
        %v676 = vunpack.c.h.b16 %v301
        %v677 = vunpack.c.l.b16 %v302
        %v678 = vunpack.c.h.b16 %v302
        %v679 = vunpack.c.l.b16 %v303
        %v680 = vunpack.c.h.b16 %v303
        %v681 = vunpack.c.l.b16 %v304
        %v682 = vunpack.c.h.b16 %v304
        %v683 = vunpack.c.l.b16 %v305
        %v684 = vunpack.c.h.b16 %v305
        %v685 = vunpack.c.l.b16 %v306
        %v686 = vunpack.c.h.b16 %v306
        %v687 = vunpack.c.l.b16 %v307
        %v688 = vunpack.c.h.b16 %v307
        %v689 = vunpack.c.l.b16 %v308
        %v690 = vunpack.c.h.b16 %v308
        %v691 = vunpack.c.l.b16 %v309
        %v692 = vunpack.c.h.b16 %v309
        %v693 = vunpack.c.l.b16 %v310
        %v694 = vunpack.c.h.b16 %v310
        %v695 = vunpack.c.l.b16 %v311
        %v696 = vunpack.c.h.b16 %v311
        %v697 = vunpack.c.l.b16 %v312
        %v698 = vunpack.c.h.b16 %v312
        %v699 = vunpack.c.l.b16 %v313
        %v700 = vunpack.c.h.b16 %v313
        %v701 = vunpack.c.l.b16 %v314
        %v702 = vunpack.c.h.b16 %v314
        %v703 = vunpack.c.l.b16 %v315
        %v704 = vunpack.c.h.b16 %v315
        %v705 = vunpack.c.l.b16 %v316
        %v706 = vunpack.c.h.b16 %v316
        %v707 = vunpack.c.l.b16 %v317
        %v708 = vunpack.c.h.b16 %v317
        %v709 = vunpack.c.l.b16 %v318
        %v710 = vunpack.c.h.b16 %v318
        %v711 = vunpack.c.l.b16 %v319
        %v712 = vunpack.c.h.b16 %v319
        %v713 = vunpack.c.l.b16 %v320
        %v714 = vunpack.c.h.b16 %v320
        %v715 = vunpack.c.l.b16 %v321
        %v716 = vunpack.c.h.b16 %v321
        %v717 = vpack.c.b16 %v469, %v461
        %v718 = vpack.c.b16 %v470, %v462
        %v719 = vpack.c.b16 %v471, %v463
        %v720 = vpack.c.b16 %v472, %v464
        %v721 = vpack.c.b16 %v473, %v465
        %v722 = vpack.c.b16 %v474, %v466
        %v723 = vpack.c.b16 %v475, %v467
        %v724 = vpack.c.b16 %v476, %v468
        %v725 = vpack.c.b16 %v485, %v477
        %v726 = vpack.c.b16 %v486, %v478
        %v727 = vpack.c.b16 %v487, %v479
        %v728 = vpack.c.b16 %v488, %v480
        %v729 = vpack.c.b16 %v489, %v481
        %v730 = vpack.c.b16 %v490, %v482
        %v731 = vpack.c.b16 %v491, %v483
        %v732 = vpack.c.b16 %v492, %v484
        %v733 = vpack.c.b16 %v501, %v493
        %v734 = vpack.c.b16 %v502, %v494
        %v735 = vpack.c.b16 %v503, %v495
        %v736 = vpack.c.b16 %v504, %v496
        %v737 = vpack.c.b16 %v505, %v497
        %v738 = vpack.c.b16 %v506, %v498
        %v739 = vpack.c.b16 %v507, %v499
        %v740 = vpack.c.b16 %v508, %v500
        %v741 = vpack.c.b16 %v517, %v509
        %v742 = vpack.c.b16 %v518, %v510
        %v743 = vpack.c.b16 %v519, %v511
        %v744 = vpack.c.b16 %v520, %v512
        %v745 = vpack.c.b16 %v521, %v513
        %v746 = vpack.c.b16 %v522, %v514
        %v747 = vpack.c.b16 %v523, %v515
        %v748 = vpack.c.b16 %v524, %v516
        %v749 = vpack.c.b16 %v533, %v525
        %v750 = vpack.c.b16 %v534, %v526
        %v751 = vpack.c.b16 %v535, %v527
        %v752 = vpack.c.b16 %v536, %v528
        %v753 = vpack.c.b16 %v537, %v529
        %v754 = vpack.c.b16 %v538, %v530
        %v755 = vpack.c.b16 %v539, %v531
        %v756 = vpack.c.b16 %v540, %v532
        %v757 = vpack.c.b16 %v549, %v541
        %v758 = vpack.c.b16 %v550, %v542
        %v759 = vpack.c.b16 %v551, %v543
        %v760 = vpack.c.b16 %v552, %v544
        %v761 = vpack.c.b16 %v553, %v545
        %v762 = vpack.c.b16 %v554, %v546
        %v763 = vpack.c.b16 %v555, %v547
        %v764 = vpack.c.b16 %v556, %v548
        %v765 = vpack.c.b16 %v565, %v557
        %v766 = vpack.c.b16 %v566, %v558
        %v767 = vpack.c.b16 %v567, %v559
        %v768 = vpack.c.b16 %v568, %v560
        %v769 = vpack.c.b16 %v569, %v561
        %v770 = vpack.c.b16 %v570, %v562
        %v771 = vpack.c.b16 %v571, %v563
        %v772 = vpack.c.b16 %v572, %v564
        %v773 = vpack.c.b16 %v581, %v573
        %v774 = vpack.c.b16 %v582, %v574
        %v775 = vpack.c.b16 %v583, %v575
        %v776 = vpack.c.b16 %v584, %v576
        %v777 = vpack.c.b16 %v585, %v577
        %v778 = vpack.c.b16 %v586, %v578
        %v779 = vpack.c.b16 %v587, %v579
        %v780 = vpack.c.b16 %v588, %v580
        %v781 = vpack.c.b16 %v597, %v589
        %v782 = vpack.c.b16 %v598, %v590
        %v783 = vpack.c.b16 %v599, %v591
        %v784 = vpack.c.b16 %v600, %v592
        %v785 = vpack.c.b16 %v601, %v593
        %v786 = vpack.c.b16 %v602, %v594
        %v787 = vpack.c.b16 %v603, %v595
        %v788 = vpack.c.b16 %v604, %v596
        %v789 = vpack.c.b16 %v613, %v605
        %v790 = vpack.c.b16 %v614, %v606
        %v791 = vpack.c.b16 %v615, %v607
        %v792 = vpack.c.b16 %v616, %v608
        %v793 = vpack.c.b16 %v617, %v609
        %v794 = vpack.c.b16 %v618, %v610
        %v795 = vpack.c.b16 %v619, %v611
        %v796 = vpack.c.b16 %v620, %v612
        %v797 = vpack.c.b16 %v629, %v621
        %v798 = vpack.c.b16 %v630, %v622
        %v799 = vpack.c.b16 %v631, %v623
        %v800 = vpack.c.b16 %v632, %v624
        %v801 = vpack.c.b16 %v633, %v625
        %v802 = vpack.c.b16 %v634, %v626
        %v803 = vpack.c.b16 %v635, %v627
        %v804 = vpack.c.b16 %v636, %v628
        %v805 = vpack.c.b16 %v645, %v637
        %v806 = vpack.c.b16 %v646, %v638
        %v807 = vpack.c.b16 %v647, %v639
        %v808 = vpack.c.b16 %v648, %v640
        %v809 = vpack.c.b16 %v649, %v641
        %v810 = vpack.c.b16 %v650, %v642
        %v811 = vpack.c.b16 %v651, %v643
        %v812 = vpack.c.b16 %v652, %v644
        %v813 = vpack.c.b16 %v661, %v653
        %v814 = vpack.c.b16 %v662, %v654
        %v815 = vpack.c.b16 %v663, %v655
        %v816 = vpack.c.b16 %v664, %v656
        %v817 = vpack.c.b16 %v665, %v657
        %v818 = vpack.c.b16 %v666, %v658
        %v819 = vpack.c.b16 %v667, %v659
        %v820 = vpack.c.b16 %v668, %v660
        %v821 = vpack.c.b16 %v677, %v669
        %v822 = vpack.c.b16 %v678, %v670
        %v823 = vpack.c.b16 %v679, %v671
        %v824 = vpack.c.b16 %v680, %v672
        %v825 = vpack.c.b16 %v681, %v673
        %v826 = vpack.c.b16 %v682, %v674
        %v827 = vpack.c.b16 %v683, %v675
        %v828 = vpack.c.b16 %v684, %v676
        %v829 = vpack.c.b16 %v693, %v685
        %v830 = vpack.c.b16 %v694, %v686
        %v831 = vpack.c.b16 %v695, %v687
        %v832 = vpack.c.b16 %v696, %v688
        %v833 = vpack.c.b16 %v697, %v689
        %v834 = vpack.c.b16 %v698, %v690
        %v835 = vpack.c.b16 %v699, %v691
        %v836 = vpack.c.b16 %v700, %v692
        %v837 = vpack.c.b16 %v709, %v701
        %v838 = vpack.c.b16 %v710, %v702
        %v839 = vpack.c.b16 %v711, %v703
        %v840 = vpack.c.b16 %v712, %v704
        %v841 = vpack.c.b16 %v713, %v705
        %v842 = vpack.c.b16 %v714, %v706
        %v843 = vpack.c.b16 %v715, %v707
        %v844 = vpack.c.b16 %v716, %v708
        %973 = vmatprep.subr.bf16.mxu0 %v718
        %974 = vmatpush1.bf16.msra.mxu0 %v717
        %975 = vmatprep.subr.bf16.mxu0 %v726
        %976 = vmatpush1.bf16.msra.mxu0 %v725
        %977 = vmatprep.subr.bf16.mxu0 %v734
        %978 = vmatpush1.bf16.msra.mxu0 %v733
        %979 = vmatprep.subr.bf16.mxu0 %v742
        %980 = vmatpush1.bf16.msra.mxu0 %v741
        %981 = vmatprep.subr.bf16.mxu0 %v750
        %982 = vmatpush1.bf16.msra.mxu0 %v749
        %983 = vmatprep.subr.bf16.mxu0 %v758
        %984 = vmatpush1.bf16.msra.mxu0 %v757
        %985 = vmatprep.subr.bf16.mxu0 %v766
        %986 = vmatpush1.bf16.msra.mxu0 %v765
        %987 = vmatprep.subr.bf16.mxu0 %v774
        %988 = vmatpush1.bf16.msra.mxu0 %v773
        %989 = vmatprep.subr.bf16.mxu0 %v782
        %990 = vmatpush1.bf16.msra.mxu0 %v781
        %991 = vmatprep.subr.bf16.mxu0 %v790
        %992 = vmatpush1.bf16.msra.mxu0 %v789
        %993 = vmatprep.subr.bf16.mxu0 %v798
        %994 = vmatpush1.bf16.msra.mxu0 %v797
        %995 = vmatprep.subr.bf16.mxu0 %v806
        %996 = vmatpush1.bf16.msra.mxu0 %v805
        %997 = vmatprep.subr.bf16.mxu0 %v814
        %998 = vmatpush1.bf16.msra.mxu0 %v813
        %999 = vmatprep.subr.bf16.mxu0 %v822
        %1000 = vmatpush1.bf16.msra.mxu0 %v821
        %1001 = vmatprep.subr.bf16.mxu0 %v830
        %1002 = vmatpush1.bf16.msra.mxu0 %v829
        %1003 = vmatprep.subr.bf16.mxu0 %v838
        %1004 = vmatpush1.bf16.msra.mxu0 %v837
        %1005 = vmatprep.mubr.bf16.mxu0 %v330
        %1006 = vmatmul.mubr.bf16.gmra.mrb[0].mxu0 %v329
        %v1007 = vpop.f32.mrb[0].mxu0
        %v1008 = vadd.f32 0.0, %v1007
        %v1009 = vpop.f32.mrb[0].mxu0
        %v1010 = vadd.f32 0.0, %v1009
        %v1011 = vpop.f32.mrb[0].mxu0
        %v1012 = vpop.f32.mrb[0].mxu0
        %1013 = vdwg.mxu0
        %1014 = vmatprep.subr.bf16.mxu0 %v720
        %1015 = vmatpush1.bf16.msra.mxu0 %v719
        %1016 = vmatprep.subr.bf16.mxu0 %v728
        %1017 = vmatpush1.bf16.msra.mxu0 %v727
        %1018 = vmatprep.subr.bf16.mxu0 %v736
        %1019 = vmatpush1.bf16.msra.mxu0 %v735
        %1020 = vmatprep.subr.bf16.mxu0 %v744
        %1021 = vmatpush1.bf16.msra.mxu0 %v743
        %1022 = vmatprep.subr.bf16.mxu0 %v752
        %1023 = vmatpush1.bf16.msra.mxu0 %v751
        %1024 = vmatprep.subr.bf16.mxu0 %v760
        %1025 = vmatpush1.bf16.msra.mxu0 %v759
        %1026 = vmatprep.subr.bf16.mxu0 %v768
        %1027 = vmatpush1.bf16.msra.mxu0 %v767
        %1028 = vmatprep.subr.bf16.mxu0 %v776
        %1029 = vmatpush1.bf16.msra.mxu0 %v775
        %1030 = vmatprep.subr.bf16.mxu0 %v784
        %1031 = vmatpush1.bf16.msra.mxu0 %v783
        %1032 = vmatprep.subr.bf16.mxu0 %v792
        %1033 = vmatpush1.bf16.msra.mxu0 %v791
        %1034 = vmatprep.subr.bf16.mxu0 %v800
        %1035 = vmatpush1.bf16.msra.mxu0 %v799
        %1036 = vmatprep.subr.bf16.mxu0 %v808
        %1037 = vmatpush1.bf16.msra.mxu0 %v807
        %1038 = vmatprep.subr.bf16.mxu0 %v816
        %1039 = vmatpush1.bf16.msra.mxu0 %v815
        %1040 = vmatprep.subr.bf16.mxu0 %v824
        %1041 = vmatpush1.bf16.msra.mxu0 %v823
        %1042 = vmatprep.subr.bf16.mxu0 %v832
        %1043 = vmatpush1.bf16.msra.mxu0 %v831
        %1044 = vmatprep.subr.bf16.mxu0 %v840
        %1045 = vmatpush1.bf16.msra.mxu0 %v839
        %1046 = vmatprep.mubr.bf16.mxu0 %v330
        %1047 = vmatmul.mubr.bf16.gmra.mrb[0].mxu0 %v329
        %v1048 = vpop.f32.mrb[0].mxu0
        %v1049 = vadd.f32 0.0, %v1048
        %v1050 = vpop.f32.mrb[0].mxu0
        %v1051 = vadd.f32 0.0, %v1050
        %v1052 = vpop.f32.mrb[0].mxu0
        %v1053 = vpop.f32.mrb[0].mxu0
        %1054 = vdwg.mxu0
        %1055 = vmatprep.subr.bf16.mxu0 %v722
        %1056 = vmatpush1.bf16.msra.mxu0 %v721
        %1057 = vmatprep.subr.bf16.mxu0 %v730
        %1058 = vmatpush1.bf16.msra.mxu0 %v729
        %1059 = vmatprep.subr.bf16.mxu0 %v738
        %1060 = vmatpush1.bf16.msra.mxu0 %v737
        %1061 = vmatprep.subr.bf16.mxu0 %v746
        %1062 = vmatpush1.bf16.msra.mxu0 %v745
        %1063 = vmatprep.subr.bf16.mxu0 %v754
        %1064 = vmatpush1.bf16.msra.mxu0 %v753
        %1065 = vmatprep.subr.bf16.mxu0 %v762
        %1066 = vmatpush1.bf16.msra.mxu0 %v761
        %1067 = vmatprep.subr.bf16.mxu0 %v770
        %1068 = vmatpush1.bf16.msra.mxu0 %v769
        %1069 = vmatprep.subr.bf16.mxu0 %v778
        %1070 = vmatpush1.bf16.msra.mxu0 %v777
        %1071 = vmatprep.subr.bf16.mxu0 %v786
        %1072 = vmatpush1.bf16.msra.mxu0 %v785
        %1073 = vmatprep.subr.bf16.mxu0 %v794
        %1074 = vmatpush1.bf16.msra.mxu0 %v793
        %1075 = vmatprep.subr.bf16.mxu0 %v802
        %1076 = vmatpush1.bf16.msra.mxu0 %v801
        %1077 = vmatprep.subr.bf16.mxu0 %v810
        %1078 = vmatpush1.bf16.msra.mxu0 %v809
        %1079 = vmatprep.subr.bf16.mxu0 %v818
        %1080 = vmatpush1.bf16.msra.mxu0 %v817
        %1081 = vmatprep.subr.bf16.mxu0 %v826
        %1082 = vmatpush1.bf16.msra.mxu0 %v825
        %1083 = vmatprep.subr.bf16.mxu0 %v834
        %1084 = vmatpush1.bf16.msra.mxu0 %v833
        %1085 = vmatprep.subr.bf16.mxu0 %v842
        %1086 = vmatpush1.bf16.msra.mxu0 %v841
        %1087 = vmatprep.mubr.bf16.mxu0 %v330
        %1088 = vmatmul.mubr.bf16.gmra.mrb[0].mxu0 %v329
        %v1089 = vpop.f32.mrb[0].mxu0
        %v1090 = vadd.f32 0.0, %v1089
        %v1091 = vpop.f32.mrb[0].mxu0
        %v1092 = vadd.f32 0.0, %v1091
        %v1093 = vpop.f32.mrb[0].mxu0
        %v1094 = vpop.f32.mrb[0].mxu0
        %1095 = vdwg.mxu0
        %1096 = vmatprep.subr.bf16.mxu0 %v724
        %1097 = vmatpush1.bf16.msra.mxu0 %v723
        %1098 = vmatprep.subr.bf16.mxu0 %v732
        %1099 = vmatpush1.bf16.msra.mxu0 %v731
        %1100 = vmatprep.subr.bf16.mxu0 %v740
        %1101 = vmatpush1.bf16.msra.mxu0 %v739
        %1102 = vmatprep.subr.bf16.mxu0 %v748
        %1103 = vmatpush1.bf16.msra.mxu0 %v747
        %1104 = vmatprep.subr.bf16.mxu0 %v756
        %1105 = vmatpush1.bf16.msra.mxu0 %v755
        %1106 = vmatprep.subr.bf16.mxu0 %v764
        %1107 = vmatpush1.bf16.msra.mxu0 %v763
        %1108 = vmatprep.subr.bf16.mxu0 %v772
        %1109 = vmatpush1.bf16.msra.mxu0 %v771
        %1110 = vmatprep.subr.bf16.mxu0 %v780
        %1111 = vmatpush1.bf16.msra.mxu0 %v779
        %1112 = vmatprep.subr.bf16.mxu0 %v788
        %1113 = vmatpush1.bf16.msra.mxu0 %v787
        %1114 = vmatprep.subr.bf16.mxu0 %v796
        %1115 = vmatpush1.bf16.msra.mxu0 %v795
        %1116 = vmatprep.subr.bf16.mxu0 %v804
        %1117 = vmatpush1.bf16.msra.mxu0 %v803
        %1118 = vmatprep.subr.bf16.mxu0 %v812
        %1119 = vmatpush1.bf16.msra.mxu0 %v811
        %1120 = vmatprep.subr.bf16.mxu0 %v820
        %1121 = vmatpush1.bf16.msra.mxu0 %v819
        %1122 = vmatprep.subr.bf16.mxu0 %v828
        %1123 = vmatpush1.bf16.msra.mxu0 %v827
        %1124 = vmatprep.subr.bf16.mxu0 %v836
        %1125 = vmatpush1.bf16.msra.mxu0 %v835
        %1126 = vmatprep.subr.bf16.mxu0 %v844
        %1127 = vmatpush1.bf16.msra.mxu0 %v843
        %1128 = vmatprep.mubr.bf16.mxu0 %v330
        %1129 = vmatmul.mubr.bf16.gmra.mrb[0].mxu0 %v329
        %v1130 = vpop.f32.mrb[0].mxu0
        %v1131 = vadd.f32 0.0, %v1130
        %v1132 = vpop.f32.mrb[0].mxu0
        %v1133 = vadd.f32 0.0, %v1132
        %v1134 = vpop.f32.mrb[0].mxu0
        %v1135 = vpop.f32.mrb[0].mxu0
        %1136 = vdwg.mxu0
        %v1145 = vcombine.low %v1008, %v1010
        %v1146 = vcombine.low %v1049, %v1051
        %v1147 = vcombine.low %v1090, %v1092
        %v1148 = vcombine.low %v1131, %v1133
        %1153 = vst [vmem:[%s192] sm:$0xff] %v1145
        %1154 = vst [vmem:[%s192 + $0x8] sm:$0xff] %v1146
        %1155 = vst [vmem:[%s192 + $0x10] sm:$0xff] %v1147
        %1156 = vst [vmem:[%s192 + $0x18] sm:$0xff] %v1148
        %s1157 = sand.u32 %s91, 1
        %s1158 = scalar_lea.sflag [#allocation4], %s1157
        %s1159 = sand.u32 %s91, 1
        %s1160 = smul.addr %s1159, 32
        %s1161 = scalar_lea.vmem [#allocation7], %s1160
        // Predicated region
        $region37: #{tpu_custom_call.1} parent=27 // pred_check
          %p1162 = pneg %p101
        $region38: #{tpu_custom_call.1} parent=27 // pred_check_branch
          %1164 = sbr.rel (%p1162) target = $region40
        $region39: #{tpu_custom_call.1} parent=27 // pred_region
          %s1166 = ssub.s32 512, 512
          %1167 = vsyncadd %s1158, %s1166
          %s1168 = smul.addr %s25, 8
          %s1169 = smul.addr %s24, 8
          %s1170 = sadd.s32 %s1168, %s1169
          %s1171 = smul.addr %s1170, 64
          %s1172 = scalar_lea.hbm %s2, %s1171
          %s1174 = sshll.u32 %s1161, 4
          %s1175 = int_to_ptr.vmem [resolvable:$true] %s1174
          %1177 = dma.vmem_to_hbm [thread:$0]  %s1175, 512, %s1172, %s1158
        $region40: #{tpu_custom_call.1} parent=27 // pred_fallthru
          _
      $region28: #{tpu_custom_call.1} parent=5 // pred_fallthru
        _
      %p1178 = scmp.le.s32.totalorder 2, %s15
      // Predicated region
      $region41: #{tpu_custom_call.1} parent=5 // pred_check
        %p1179 = pneg %p1178
      $region42: #{tpu_custom_call.1} parent=5 // pred_check_branch
        %1181 = sbr.rel (%p1179) target = $region44
      $region43: #{tpu_custom_call.1} parent=5 // pred_region
        %s1182 = ssub.s32 %s15, 2
        // Predicated region
        $region45: #{tpu_custom_call.1} parent=43 // pred_check
          %p1183 = pneg %p107
        $region46: #{tpu_custom_call.1} parent=43 // pred_check_branch
          %1185 = sbr.rel (%p1183) target = $region48
        $region47: #{tpu_custom_call.1} parent=43 // pred_region
          %s1186 = sand.u32 %s92, 1
          %s1187 = scalar_lea.sflag [#allocation4], %s1186
          %s1188 = sand.u32 %s92, 1
          %s1189 = smul.addr %s1188, 32
          %s1190 = scalar_lea.vmem [#allocation7], %s1189
          %1191 = dma.done %s1187, 512
        $region48: #{tpu_custom_call.1} parent=43 // pred_fallthru
          _
      $region44: #{tpu_custom_call.1} parent=5 // pred_fallthru
        _
    $region6: #{tpu_custom_call.1} parent=1 // loop_footer
      %s19 = sadd.s32 1, %s15
    $region7: #{tpu_custom_call.1} parent=1 // loop_footer_branch
      %14 = sbr.rel target = $region3
    $region8: #{tpu_custom_call.1} parent=1 // loop_exit
      _
    %1192 = vsyncpa [#allocation3], 1
    %s1193 = scalar_lea.sflag [#allocation3], 1
    %1194 = vsyncpa %s1193, 1
    %1195 = vsyncpa [#allocation6], 1
    %1196 = vsyncpa [#allocation4], 1
    %s1197 = scalar_lea.sflag [#allocation4], 1
    %1198 = vsyncpa %s1197, 1

</llo_original>
